<compile_context>
chip_gen: v5e
topology: v5e:2x2
jax: 0.10.0
libtpu: 0.0.40
codegen_flags: <defaults>
</compile_context>

<pallas_src>
import jax
import jax.numpy as jnp
from jax.experimental import pallas as pl
from jax.experimental.pallas import tpu as pltpu

LANE = 128          # vreg lane width
SUBLANE = 8         # f32 sublane count
BLOCK_ROWS = 2048   # (2048, 128) f32 = 1 MiB per input block
CORE_SPLIT = 2      # leading "parallel" axis for v7x megacore; harmless on 1-TC chips


def _make_l1_kernel(block_r, per_core_blocks, valid_rows):
    """Kernel: accumulate row-group partial sums of |a - b| into o_ref (8,128)."""

    def kernel(a_ref, b_ref, o_ref):
        c = pl.program_id(0)   # core-split axis ("parallel")
        i = pl.program_id(1)   # reduction axis ("arbitrary")

        @pl.when(i == 0)
        def _():
            o_ref[...] = jnp.zeros_like(o_ref)

        a = a_ref[...].astype(jnp.float32)
        b = b_ref[...].astype(jnp.float32)
        d = jnp.abs(a - b)                                   # (block_r, 128)

        # Mask rows beyond the logical end of the slab (partial edge block or
        # phantom block of the core-split).  Purely VPU (compare + select).
        row = jax.lax.broadcasted_iota(jnp.int32, d.shape, 0)
        glob_row = (c * per_core_blocks + i) * block_r + row
        d = jnp.where(glob_row < valid_rows, d, 0.0)

        # Pure-VPU partial reduce: (block_r,128) -> (8,128) via vreg-group add.
        partial = jnp.sum(d.reshape(block_r // SUBLANE, SUBLANE, LANE), axis=0)
        o_ref[...] += partial

    return kernel


@jax.jit
def mel_spec_loss(melspec_real, melspec_fake):
    """Pallas equivalent of MelSpecLoss.forward: mean(|real - fake|) * 45."""
    assert melspec_real.shape == melspec_fake.shape
    n = melspec_real.size

    a = jnp.ravel(melspec_real)
    b = jnp.ravel(melspec_fake)

    # Minimal padding: only up to the next (8,128)-aligned boundary.  Both
    # sides padded with zeros => |diff| contribution of the pad region is 0.
    rows = pl.cdiv(n, LANE)
    rows_p = ((rows + SUBLANE - 1) // SUBLANE) * SUBLANE
    padded = rows_p * LANE
    if padded != n:
        a = jnp.pad(a, (0, padded - n))
        b = jnp.pad(b, (0, padded - n))
    a2 = a.reshape(rows_p, LANE)
    b2 = b.reshape(rows_p, LANE)

    block_r = rows_p if rows_p <= BLOCK_ROWS else BLOCK_ROWS
    total_blocks = pl.cdiv(rows_p, block_r)
    per_core = pl.cdiv(total_blocks, CORE_SPLIT)

    # Clamp the block index so phantom blocks (core-split remainder) never
    # index out of bounds; their contribution is zeroed by the in-kernel mask.
    def in_index(c, i):
        return (jnp.minimum(c * per_core + i, total_blocks - 1), 0)

    kernel = _make_l1_kernel(block_r, per_core, rows_p)

    partials = pl.pallas_call(
        kernel,
        out_shape=jax.ShapeDtypeStruct((CORE_SPLIT * SUBLANE, LANE), jnp.float32),
        grid_spec=pltpu.PrefetchScalarGridSpec(
            num_scalar_prefetch=0,
            grid=(CORE_SPLIT, per_core),
            in_specs=[
                pl.BlockSpec((block_r, LANE), in_index),
                pl.BlockSpec((block_r, LANE), in_index),
            ],
            out_specs=pl.BlockSpec((SUBLANE, LANE), lambda c, i: (c, 0)),
        ),
        compiler_params=pltpu.CompilerParams(
            dimension_semantics=("parallel", "arbitrary")),
    )(a2, b2)

    return (jnp.sum(partials) / jnp.float32(n)) * jnp.float32(45.0)


def _reference(melspec_real, melspec_fake):
    r = melspec_real.astype(jnp.float32)
    f = melspec_fake.astype(jnp.float32)
    return jnp.mean(jnp.abs(r - f)) * 45.0


if __name__ == "__main__":
    key = jax.random.PRNGKey(0)

    # Small mel-spectrogram-like shapes: (batch, n_mels, frames).
    cases = [
        (2, 80, 64),    # element count divisible by 1024 -> zero-copy path
        (2, 80, 37),    # odd size -> minimal pad + in-kernel masking
        (4, 80, 900),   # multi-block grid -> partial edge block on core 1
    ]

    for idx, shape in enumerate(cases):
        k1, k2, key = jax.random.split(key, 3)
        real = jax.random.normal(k1, shape, dtype=jnp.float32)
        fake = jax.random.normal(k2, shape, dtype=jnp.float32)

        loss = jax.block_until_ready(mel_spec_loss(real, fake))
        ref = _reference(real, fake)
        assert jnp.allclose(loss, ref, rtol=1e-5, atol=1e-5), (shape, loss, ref)

    print("KERNEL_OK")
</pallas_src>

<mosaic_0001>
module attributes {stable_mosaic.version = 11 : i64} {
  func.func @kernel(%arg0: i32, %arg1: i32, %arg2: memref<80x128xf32, #tpu.memory_space<vmem>>, %arg3: memref<80x128xf32, #tpu.memory_space<vmem>>, %arg4: memref<8x128xf32, #tpu.memory_space<vmem>>) attributes {dimension_semantics = [#tpu.dimension_semantics<parallel>, #tpu.dimension_semantics<arbitrary>], iteration_bounds = array<i64: 2, 1>, scalar_prefetch = 0 : i64, scratch_operands = 0 : i64, tpu.core_type = #tpu.core_type<tc>, window_params = [{transform_indices = @transform_0, window_bounds = array<i64: 80, 128>}, {transform_indices = @transform_1, window_bounds = array<i64: 80, 128>}, {transform_indices = @transform_2, window_bounds = array<i64: 8, 128>}]} {
    %c0_i32 = arith.constant 0 : i32
    %0 = arith.cmpi eq, %arg1, %c0_i32 : i32
    %1 = arith.extui %0 : i1 to i32
    %c0_i32_0 = arith.constant 0 : i32
    %2 = arith.cmpi ne, %1, %c0_i32_0 : i32
    scf.if %2 {
      %cst_10 = arith.constant 0.000000e+00 : f32
      %22 = vector.broadcast %cst_10 : f32 to vector<8x128xf32>
      %c0_11 = arith.constant 0 : index
      %c0_12 = arith.constant 0 : index
      %23 = vector.load %arg4[%c0_11, %c0_12] : memref<8x128xf32, #tpu.memory_space<vmem>>, vector<8x128xf32>
      tpu.vector_store %arg4[%c0_11, %c0_12], %22 {strides = array<i32>} : memref<8x128xf32, #tpu.memory_space<vmem>>, vector<8x128xf32>,
    } else {
    }
    %c0 = arith.constant 0 : index
    %c0_1 = arith.constant 0 : index
    %3 = vector.load %arg2[%c0, %c0_1] : memref<80x128xf32, #tpu.memory_space<vmem>>, vector<80x128xf32>
    %c0_2 = arith.constant 0 : index
    %c0_3 = arith.constant 0 : index
    %4 = vector.load %arg3[%c0_2, %c0_3] : memref<80x128xf32, #tpu.memory_space<vmem>>, vector<80x128xf32>
    %5 = arith.subf %3, %4 : vector<80x128xf32>
    %6 = math.absf %5 : vector<80x128xf32>
    %7 = tpu.iota {dimensions = array<i32: 0>} : vector<80x128xi32>
    %c1_i32 = arith.constant 1 : i32
    %8 = arith.muli %arg0, %c1_i32 : i32
    %9 = arith.addi %8, %arg1 : i32
    %c80_i32 = arith.constant 80 : i32
    %10 = arith.muli %9, %c80_i32 : i32
    %11 = vector.broadcast %10 : i32 to vector<80x128xi32>
    %12 = arith.addi %11, %7 : vector<80x128xi32>
    %c80_i32_4 = arith.constant 80 : i32
    %13 = vector.broadcast %c80_i32_4 : i32 to vector<80x128xi32>
    %14 = arith.cmpi slt, %12, %13 : vector<80x128xi32>
    %cst = arith.constant 0.000000e+00 : f32
    %15 = vector.broadcast %cst : f32 to vector<80x128xf32>
    %16 = arith.select %14, %6, %15 : vector<80x128xi1>, vector<80x128xf32>
    %17 = vector.shape_cast %16 : vector<80x128xf32> to vector<10x8x128xf32>
    %cst_5 = arith.constant dense<0.000000e+00> : vector<8x128xf32>
    %18 = vector.multi_reduction <add>, %17, %cst_5 [0] : vector<10x8x128xf32> to vector<8x128xf32>
    %c0_6 = arith.constant 0 : index
    %c0_7 = arith.constant 0 : index
    %19 = vector.load %arg4[%c0_6, %c0_7] : memref<8x128xf32, #tpu.memory_space<vmem>>, vector<8x128xf32>
    %20 = arith.addf %19, %18 : vector<8x128xf32>
    %c0_8 = arith.constant 0 : index
    %c0_9 = arith.constant 0 : index
    %21 = vector.load %arg4[%c0_8, %c0_9] : memref<8x128xf32, #tpu.memory_space<vmem>>, vector<8x128xf32>
    tpu.vector_store %arg4[%c0_8, %c0_9], %20 {strides = array<i32>} : memref<8x128xf32, #tpu.memory_space<vmem>>, vector<8x128xf32>,
    return
  }
  func.func @transform_0(%arg0: i32, %arg1: i32) -> (i32, i32) {
    %c1_i32 = arith.constant 1 : i32
    %0 = arith.muli %arg0, %c1_i32 : i32
    %1 = arith.addi %0, %arg1 : i32
    %c0_i32 = arith.constant 0 : i32
    %2 = arith.minsi %1, %c0_i32 : i32
    %c0_i32_0 = arith.constant 0 : i32
    %c0_i32_1 = arith.constant 0 : i32
    return %2, %c0_i32_0 : i32, i32
  }
  func.func @transform_1(%arg0: i32, %arg1: i32) -> (i32, i32) {
    %c1_i32 = arith.constant 1 : i32
    %0 = arith.muli %arg0, %c1_i32 : i32
    %1 = arith.addi %0, %arg1 : i32
    %c0_i32 = arith.constant 0 : i32
    %2 = arith.minsi %1, %c0_i32 : i32
    %c0_i32_0 = arith.constant 0 : i32
    %c0_i32_1 = arith.constant 0 : i32
    return %2, %c0_i32_0 : i32, i32
  }
  func.func @transform_2(%arg0: i32, %arg1: i32) -> (i32, i32) {
    %c0_i32 = arith.constant 0 : i32
    %c0_i32_0 = arith.constant 0 : i32
    return %arg0, %c0_i32 : i32, i32
  }
}

</mosaic_0001>

<llo_original>
// kernel: mel_spec_loss.1
$region0: #{mel_spec_loss.1}
  #allocation0 [shape = 'u32[]', space=smem, size = 0x4, offset = 0x4, fixed_abs, tag = 'smem constant byte address 0x4 - core index']
  #allocation1 [shape = 'u32[72,128]{1,0:T(1,128)}', space=vmem, size = 0x9000, scoped, tag = 'internal scratch']
  %s0 = inlined_call_operand.vmem [shape: f32[80,128], index: 0, kind: input, shape index: {}]
  %s1 = inlined_call_operand.vmem [shape: f32[80,128], index: 1, kind: input, shape index: {}]
  %s2 = inlined_call_operand.vmem [shape: f32[16,128], index: 2, kind: output, shape index: {}]
  %s3 = sld [smem:[#allocation0]]
  $region45: #{mel_spec_loss.1} parent=0
    _
  %s5 = ssub.s32 1, %s3
  %s6 = scalar_select 0, %s5, %s3
  loop: start=0, step=1, limit=4
  $region2: #{mel_spec_loss.1} parent=0 // loop_pre_header
    _
  $region3: #{mel_spec_loss.1} parent=0 // loop_header
    %s8 = sphi 0, %s12
    %p9 = scmp.ge.s32.totalorder %s8, 4
    %s15 = sphi 0, %s27
    %s16 = sphi 0, %s23
    %s17 = sphi 0, %s15
    %s18 = sphi 0, %s16
    %s19 = sphi 0, %s17
    %s20 = sphi 0, %s18
    %s36 = sphi 0, %s38
    %s39 = sphi 0, %s36
    %s40 = sphi 0, %s39
    %s56 = sphi 0, %s40
    %s68 = sphi 0, %s70
    %s71 = sphi 0, %s68
    %s72 = sphi 0, %s71
    %s88 = sphi 0, %s72
    %s94 = sphi 0, %s96
    %s97 = sphi 0, %s94
    %s98 = sphi 0, %s97
    %s114 = sphi 0, %s98
  $region4: #{mel_spec_loss.1} parent=0 // loop_header_branch
    %11 = sbr.rel (%p9) target = $region8
  $region5: #{mel_spec_loss.1} parent=0 // loop_body
    %s13 = ssub.s32 %s8, 1
    %s14 = ssub.s32 %s8, 2
    %s21 = sadd.s32 1, %s16
    %p22 = scmp.ge.s32.totalorder %s21, 1
    %s23 = scalar_select %p22, 0, %s21
    %s24 = sadd.s32 1, %s15
    %s25 = scalar_select %p22, %s24, %s15
    %p26 = scmp.ge.s32.totalorder %s25, 2
    %s27 = scalar_select %p26, 0, %s25
    %s28 = sadd.s32 %s15, %s16
    %p29 = scmp.lt.s32.totalorder %s28, 0
    %s30 = scalar_select %p29, %s28, 0
    %s31 = sadd.s32 %s27, %s23
    %p32 = scmp.lt.s32.totalorder %s31, 0
    %s33 = scalar_select %p32, %s31, 0
    %s34 = ssub.s32 %s30, %s33
    %p35 = scmp.eq.s32.totalorder %s34, 0
    %s37 = sadd.s32 %s36, 1
    %s38 = scalar_select %p35, %s36, %s37
    %p41 = pneg %p35
    %p42 = scmp.eq.s32.totalorder %s8, 1
    %p43 = por %p41, %p42
    %p44 = scmp.ne.s32.totalorder %s36, %s39
    %p45 = scmp.eq.s32.totalorder %s8, 0
    %p46 = por %p44, %p45
    %p47 = scmp.ne.s32.totalorder %s36, %s39
    %p48 = scmp.eq.s32.totalorder %s13, 1
    %p49 = por %p47, %p48
    %p50 = scmp.ne.s32.totalorder %s39, %s40
    %p51 = scmp.eq.s32.totalorder %s13, 0
    %p52 = por %p50, %p51
    %p53 = scmp.ne.s32.totalorder %s39, %s40
    %p54 = scmp.eq.s32.totalorder %s14, 1
    %p55 = por %p53, %p54
    %p57 = scmp.ne.s32.totalorder %s40, %s56
    %p58 = scmp.eq.s32.totalorder %s14, 0
    %p59 = por %p57, %p58
    %s60 = sadd.s32 %s15, %s16
    %p61 = scmp.lt.s32.totalorder %s60, 0
    %s62 = scalar_select %p61, %s60, 0
    %s63 = sadd.s32 %s27, %s23
    %p64 = scmp.lt.s32.totalorder %s63, 0
    %s65 = scalar_select %p64, %s63, 0
    %s66 = ssub.s32 %s62, %s65
    %p67 = scmp.eq.s32.totalorder %s66, 0
    %s69 = sadd.s32 %s68, 1
    %s70 = scalar_select %p67, %s68, %s69
    %p73 = pneg %p67
    %p74 = scmp.eq.s32.totalorder %s8, 1
    %p75 = por %p73, %p74
    %p76 = scmp.ne.s32.totalorder %s68, %s71
    %p77 = scmp.eq.s32.totalorder %s8, 0
    %p78 = por %p76, %p77
    %p79 = scmp.ne.s32.totalorder %s68, %s71
    %p80 = scmp.eq.s32.totalorder %s13, 1
    %p81 = por %p79, %p80
    %p82 = scmp.ne.s32.totalorder %s71, %s72
    %p83 = scmp.eq.s32.totalorder %s13, 0
    %p84 = por %p82, %p83
    %p85 = scmp.ne.s32.totalorder %s71, %s72
    %p86 = scmp.eq.s32.totalorder %s14, 1
    %p87 = por %p85, %p86
    %p89 = scmp.ne.s32.totalorder %s72, %s88
    %p90 = scmp.eq.s32.totalorder %s14, 0
    %p91 = por %p89, %p90
    %s92 = ssub.s32 %s15, %s27
    %p93 = scmp.eq.s32.totalorder %s92, 0
    %s95 = sadd.s32 %s94, 1
    %s96 = scalar_select %p93, %s94, %s95
    %p99 = pneg %p93
    %p100 = scmp.eq.s32.totalorder %s8, 1
    %p101 = por %p99, %p100
    %p102 = scmp.ne.s32.totalorder %s94, %s97
    %p103 = scmp.eq.s32.totalorder %s8, 0
    %p104 = por %p102, %p103
    %p105 = scmp.ne.s32.totalorder %s94, %s97
    %p106 = scmp.eq.s32.totalorder %s13, 1
    %p107 = por %p105, %p106
    %p108 = scmp.ne.s32.totalorder %s97, %s98
    %p109 = scmp.eq.s32.totalorder %s13, 0
    %p110 = por %p108, %p109
    %p111 = scmp.ne.s32.totalorder %s97, %s98
    %p112 = scmp.eq.s32.totalorder %s14, 1
    %p113 = por %p111, %p112
    %p115 = scmp.ne.s32.totalorder %s98, %s114
    %p116 = scmp.eq.s32.totalorder %s14, 0
    %p117 = por %p115, %p116
    %p118 = scmp.le.s32.totalorder 1, %s8
    %p119 = scmp.lt.s32.totalorder %s8, 3
    %p120 = pnand %p118, %p119
    %p121 = pneg %p120
    // Predicated region
    $region9: #{mel_spec_loss.1} parent=5 // pred_check
      _
    $region10: #{mel_spec_loss.1} parent=5 // pred_check_branch
      %123 = sbr.rel (%p120) target = $region12
    $region11: #{mel_spec_loss.1} parent=5 // pred_region
      %s124 = ssub.s32 %s8, 1
    $region12: #{mel_spec_loss.1} parent=5 // pred_fallthru
      _
    %p125 = scmp.lt.s32.totalorder %s8, 2
    // Predicated region
    $region13: #{mel_spec_loss.1} parent=5 // pred_check
      %p126 = pneg %p125
    $region14: #{mel_spec_loss.1} parent=5 // pred_check_branch
      %128 = sbr.rel (%p126) target = $region16
    $region15: #{mel_spec_loss.1} parent=5 // pred_region
      // Predicated region
      $region17: #{mel_spec_loss.1} parent=15 // pred_check
        %p129 = pneg %p46
      $region18: #{mel_spec_loss.1} parent=15 // pred_check_branch
        %131 = sbr.rel (%p129) target = $region20
      $region19: #{mel_spec_loss.1} parent=15 // pred_region
        %s132 = sadd.s32 %s15, %s16
        %p133 = scmp.lt.s32.totalorder %s132, 0
        %s134 = scalar_select %p133, %s132, 0
        %s135 = smul.u32 10, %s134
        %p136 = scmp.lt.s32.totalorder %s135, 9
        %s137 = scalar_select %p136, %s135, 9
        %s138 = smul.addr %s137, 8
        %s139 = scalar_lea.vmem %s0, %s138
        %s140 = sadd.s32 %s15, %s16
        %p141 = scmp.lt.s32.totalorder %s140, 0
        %s142 = scalar_select %p141, %s140, 0
        %s143 = smul.u32 10, %s142
      $region20: #{mel_spec_loss.1} parent=15 // pred_fallthru
        _
      // Predicated region
      $region21: #{mel_spec_loss.1} parent=15 // pred_check
        %p144 = pneg %p78
      $region22: #{mel_spec_loss.1} parent=15 // pred_check_branch
        %146 = sbr.rel (%p144) target = $region24
      $region23: #{mel_spec_loss.1} parent=15 // pred_region
        %s147 = sadd.s32 %s15, %s16
        %p148 = scmp.lt.s32.totalorder %s147, 0
        %s149 = scalar_select %p148, %s147, 0
        %s150 = smul.u32 10, %s149
        %p151 = scmp.lt.s32.totalorder %s150, 9
        %s152 = scalar_select %p151, %s150, 9
        %s153 = smul.addr %s152, 8
        %s154 = scalar_lea.vmem %s1, %s153
        %s155 = sadd.s32 %s15, %s16
        %p156 = scmp.lt.s32.totalorder %s155, 0
        %s157 = scalar_select %p156, %s155, 0
        %s158 = smul.u32 10, %s157
      $region24: #{mel_spec_loss.1} parent=15 // pred_fallthru
        _
    $region16: #{mel_spec_loss.1} parent=5 // pred_fallthru
      _
    %p159 = scmp.le.s32.totalorder 1, %s8
    %p160 = scmp.lt.s32.totalorder %s8, 3
    %p161 = pnand %p159, %p160
    %p162 = pneg %p161
    // Predicated region
    $region25: #{mel_spec_loss.1} parent=5 // pred_check
      _
    $region26: #{mel_spec_loss.1} parent=5 // pred_check_branch
      %164 = sbr.rel (%p161) target = $region28
    $region27: #{mel_spec_loss.1} parent=5 // pred_region
      %s165 = ssub.s32 %s8, 1
      %s166 = sadd.s32 %s17, %s18
      %p167 = scmp.lt.s32.totalorder %s166, 0
      %s168 = scalar_select %p167, %s166, 0
      %s169 = smul.u32 10, %s168
      %p170 = scmp.lt.s32.totalorder %s169, 9
      %s171 = scalar_select %p170, %s169, 9
      %s172 = smul.addr %s171, 8
      %s173 = scalar_lea.vmem %s0, %s172
      %p174 = pneg %p52
      %p175 = pneg %p49
      %s176 = sadd.s32 %s17, %s18
      %p177 = scmp.lt.s32.totalorder %s176, 0
      %s178 = scalar_select %p177, %s176, 0
      %s179 = smul.u32 10, %s178
      %p180 = scmp.lt.s32.totalorder %s179, 9
      %s181 = scalar_select %p180, %s179, 9
      %s182 = smul.addr %s181, 8
      %s183 = scalar_lea.vmem %s1, %s182
      %p184 = pneg %p84
      %p185 = pneg %p81
      %p186 = pneg %p110
      %p187 = pneg %p107
      %p188 = scmp.lt.s32.totalorder %s17, 1
      %s189 = scalar_select %p188, %s17, 1
      %s190 = smul.addr %s189, 8
      %s191 = scalar_lea.vmem %s2, %s190
      %s192 = sadd.s32 %s17, %s18
      %p193 = scmp.lt.s32.totalorder %s192, 0
      %s194 = scalar_select %p193, %s192, 0
      %s195 = smul.u32 10, %s194
      %p196 = scmp.lt.s32.totalorder %s195, 9
      %s197 = scalar_select %p196, %s195, 9
      %s198 = smul.addr %s197, 8
      %s199 = scalar_lea.vmem %s0, %s198
      %s200 = sadd.s32 %s17, %s18
      %p201 = scmp.lt.s32.totalorder %s200, 0
      %s202 = scalar_select %p201, %s200, 0
      %s203 = smul.u32 10, %s202
      %s204 = sadd.s32 %s17, %s18
      %p205 = scmp.lt.s32.totalorder %s204, 0
      %s206 = scalar_select %p205, %s204, 0
      %s207 = smul.u32 10, %s206
      %p208 = scmp.lt.s32.totalorder %s207, 9
      %s209 = scalar_select %p208, %s207, 9
      %s210 = smul.addr %s209, 8
      %s211 = scalar_lea.vmem %s1, %s210
      %s212 = sadd.s32 %s17, %s18
      %p213 = scmp.lt.s32.totalorder %s212, 0
      %s214 = scalar_select %p213, %s212, 0
      %s215 = smul.u32 10, %s214
      %p216 = scmp.lt.s32.totalorder %s17, 1
      %s217 = scalar_select %p216, %s17, 1
      %s218 = smul.addr %s217, 8
      %s219 = scalar_lea.vmem %s2, %s218
      %p220 = scmp.eq.s32.totalorder %s18, 0
      // Predicated region
      $region29: #{mel_spec_loss.1} parent=27 // pred_check
        %p221 = pneg %p220
      $region30: #{mel_spec_loss.1} parent=27 // pred_check_branch
        %223 = sbr.rel (%p221) target = $region32
      $region31: #{mel_spec_loss.1} parent=27 // pred_region
        %224 = vst [vmem:[%s219] sm:$0xff] 0.0
      $region32: #{mel_spec_loss.1} parent=27 // pred_fallthru
        _
      %v225 = vld [vmem:[%s199] sm:$0xff]
      %v226 = vld [vmem:[%s199 + $0x8] sm:$0xff]
      %v227 = vld [vmem:[%s199 + $0x10] sm:$0xff]
      %v228 = vld [vmem:[%s199 + $0x18] sm:$0xff]
      %v229 = vld [vmem:[%s199 + $0x20] sm:$0xff]
      %v230 = vld [vmem:[%s199 + $0x28] sm:$0xff]
      %v231 = vld [vmem:[%s199 + $0x30] sm:$0xff]
      %v232 = vld [vmem:[%s199 + $0x38] sm:$0xff]
      %v233 = vld [vmem:[%s199 + $0x40] sm:$0xff]
      %v234 = vld [vmem:[%s199 + $0x48] sm:$0xff]
      %v235 = vld [vmem:[%s211] sm:$0xff]
      %v236 = vld [vmem:[%s211 + $0x8] sm:$0xff]
      %v237 = vld [vmem:[%s211 + $0x10] sm:$0xff]
      %v238 = vld [vmem:[%s211 + $0x18] sm:$0xff]
      %v239 = vld [vmem:[%s211 + $0x20] sm:$0xff]
      %v240 = vld [vmem:[%s211 + $0x28] sm:$0xff]
      %v241 = vld [vmem:[%s211 + $0x30] sm:$0xff]
      %v242 = vld [vmem:[%s211 + $0x38] sm:$0xff]
      %v243 = vld [vmem:[%s211 + $0x40] sm:$0xff]
      %v244 = vld [vmem:[%s211 + $0x48] sm:$0xff]
      %v245 = vsub.f32 %v225, %v235
      %v246 = vsub.f32 %v226, %v236
      %v247 = vsub.f32 %v227, %v237
      %v248 = vsub.f32 %v228, %v238
      %v249 = vsub.f32 %v229, %v239
      %v250 = vsub.f32 %v230, %v240
      %v251 = vsub.f32 %v231, %v241
      %v252 = vsub.f32 %v232, %v242
      %v253 = vsub.f32 %v233, %v243
      %v254 = vsub.f32 %v234, %v244
      %v255 = vand.u32 2147483647, %v245
      %v256 = vand.u32 2147483647, %v246
      %v257 = vand.u32 2147483647, %v247
      %v258 = vand.u32 2147483647, %v248
      %v259 = vand.u32 2147483647, %v249
      %v260 = vand.u32 2147483647, %v250
      %v261 = vand.u32 2147483647, %v251
      %v262 = vand.u32 2147483647, %v252
      %v263 = vand.u32 2147483647, %v253
      %v264 = vand.u32 2147483647, %v254
      %v265 = vlaneseq
      %v266 = vshrl.u32 %v265, 7
      %v267 = vadd.s32 %v266, 8
      %v268 = vadd.s32 %v266, 16
      %v269 = vadd.s32 %v266, 24
      %v270 = vadd.s32 %v266, 32
      %v271 = vadd.s32 %v266, 40
      %v272 = vadd.s32 %v266, 48
      %v273 = vadd.s32 %v266, 56
      %v274 = vadd.s32 %v266, 64
      %v275 = vadd.s32 %v266, 72
      %s276 = sadd.s32 %s17, %s18
      %s277 = smul.u32 %s276, 80
      %v278 = vstv %s277
      %v279 = vadd.s32 %v278, %v266
      %v280 = vadd.s32 %v278, %v267
      %v281 = vadd.s32 %v278, %v268
      %v282 = vadd.s32 %v278, %v269
      %v283 = vadd.s32 %v278, %v270
      %v284 = vadd.s32 %v278, %v271
      %v285 = vadd.s32 %v278, %v272
      %v286 = vadd.s32 %v278, %v273
      %v287 = vadd.s32 %v278, %v274
      %v288 = vadd.s32 %v278, %v275
      %vm289 = vcmp.lt.s32.totalorder %v279, 80
      %vm290 = vcmp.lt.s32.totalorder %v280, 80
      %vm291 = vcmp.lt.s32.totalorder %v281, 80
      %vm292 = vcmp.lt.s32.totalorder %v282, 80
      %vm293 = vcmp.lt.s32.totalorder %v283, 80
      %vm294 = vcmp.lt.s32.totalorder %v284, 80
      %vm295 = vcmp.lt.s32.totalorder %v285, 80
      %vm296 = vcmp.lt.s32.totalorder %v286, 80
      %vm297 = vcmp.lt.s32.totalorder %v287, 80
      %vm298 = vcmp.lt.s32.totalorder %v288, 80
      %v299 = vsel %vm289, %v255, 0.0
      %v300 = vsel %vm290, %v256, 0.0
      %v301 = vsel %vm291, %v257, 0.0
      %v302 = vsel %vm292, %v258, 0.0
      %v303 = vsel %vm293, %v259, 0.0
      %v304 = vsel %vm294, %v260, 0.0
      %v305 = vsel %vm295, %v261, 0.0
      %v306 = vsel %vm296, %v262, 0.0
      %v307 = vsel %vm297, %v263, 0.0
      %v308 = vsel %vm298, %v264, 0.0
      %v309 = vadd.f32 %v299, %v300
      %v310 = vadd.f32 %v309, %v301
      %v311 = vadd.f32 %v310, %v302
      %v312 = vadd.f32 %v311, %v303
      %v313 = vadd.f32 %v312, %v304
      %v314 = vadd.f32 %v313, %v305
      %v315 = vadd.f32 %v314, %v306
      %v316 = vadd.f32 %v315, %v307
      %v317 = vadd.f32 %v316, %v308
      %v318 = vld [vmem:[%s219] sm:$0xff]
      %v319 = vadd.f32 %v318, %v317
      %320 = vst [vmem:[%s219] sm:$0xff] %v319
      %p321 = scmp.lt.s32.totalorder %s17, 1
      %s322 = scalar_select %p321, %s17, 1
      %s323 = smul.addr %s322, 8
      %s324 = scalar_lea.vmem %s2, %s323
      // Predicated region
      $region33: #{mel_spec_loss.1} parent=27 // pred_check
        %p325 = pneg %p107
      $region34: #{mel_spec_loss.1} parent=27 // pred_check_branch
        %327 = sbr.rel (%p325) target = $region36
      $region35: #{mel_spec_loss.1} parent=27 // pred_region
        _
      $region36: #{mel_spec_loss.1} parent=27 // pred_fallthru
        _
    $region28: #{mel_spec_loss.1} parent=5 // pred_fallthru
      _
    %p328 = scmp.le.s32.totalorder 2, %s8
    // Predicated region
    $region37: #{mel_spec_loss.1} parent=5 // pred_check
      %p329 = pneg %p328
    $region38: #{mel_spec_loss.1} parent=5 // pred_check_branch
      %331 = sbr.rel (%p329) target = $region40
    $region39: #{mel_spec_loss.1} parent=5 // pred_region
      %s332 = ssub.s32 %s8, 2
      // Predicated region
      $region41: #{mel_spec_loss.1} parent=39 // pred_check
        %p333 = pneg %p113
      $region42: #{mel_spec_loss.1} parent=39 // pred_check_branch
        %335 = sbr.rel (%p333) target = $region44
      $region43: #{mel_spec_loss.1} parent=39 // pred_region
        %p336 = scmp.lt.s32.totalorder %s19, 1
        %s337 = scalar_select %p336, %s19, 1
        %s338 = smul.addr %s337, 8
        %s339 = scalar_lea.vmem %s2, %s338
      $region44: #{mel_spec_loss.1} parent=39 // pred_fallthru
        _
    $region40: #{mel_spec_loss.1} parent=5 // pred_fallthru
      _
  $region6: #{mel_spec_loss.1} parent=0 // loop_footer
    %s12 = sadd.s32 1, %s8
  $region7: #{mel_spec_loss.1} parent=0 // loop_footer_branch
    %7 = sbr.rel target = $region3
  $region8: #{mel_spec_loss.1} parent=0 // loop_exit
    _

</llo_original>
